<compile_context>
chip_gen: v6e
topology: v6e:2x2x1
jax: 0.10.0
libtpu: 0.0.40
codegen_flags: <defaults>
</compile_context>

<pallas_src>
import functools

import jax
import jax.numpy as jnp
from jax import lax
from jax.experimental import pallas as pl
from jax.experimental.pallas import tpu as pltpu


# Large finite negative instead of -inf: avoids (-inf) - (-inf) = NaN in the online
# softmax for rows of a tile that are fully masked (exp underflows to exactly 0).
MASK_VALUE = -1e30


def mha_flash_kernel(xq_ref, xkv_ref, wq_ref, wkv_ref, wo_ref, bo_ref, o_ref,
                     kv_cache, q_scr, m_scr, l_scr, acc_scr, out_scr,
                     *, d_head, block_q, block_k, operand_dtype):
    qi = pl.program_id(1)
    h = pl.program_id(2)
    ki = pl.program_id(3)
    num_heads = pl.num_programs(2)
    nk = pl.num_programs(3)

    # ---- Fused K|V projection, computed only at the first q-tile and cached in VMEM.
    @pl.when(qi == 0)
    def _fill_kv():
        xkv = xkv_ref[0]                                           # (TK, d_in)
        kv = jnp.dot(xkv, wkv_ref[0],                              # (TK, 2*d_head)
                     preferred_element_type=jnp.float32)
        kv_cache[h * nk + ki] = kv.astype(kv_cache.dtype)

    # ---- Per (q-tile, head) init: scaled Q projection + online-softmax state.
    @pl.when(ki == 0)
    def _init_q():
        xq = xq_ref[0]                                             # (TQ, d_in)
        scale = 1.0 / (float(d_head) ** 0.5)
        q = jnp.dot(xq, wq_ref[0], preferred_element_type=jnp.float32) * scale
        q_scr[...] = q.astype(q_scr.dtype)                         # (TQ, d_head)
        m_scr[...] = jnp.full_like(m_scr, MASK_VALUE)
        l_scr[...] = jnp.zeros_like(l_scr)
        acc_scr[...] = jnp.zeros_like(acc_scr)

    @pl.when(jnp.logical_and(h == 0, ki == 0))
    def _init_out():
        out_scr[...] = jnp.zeros_like(out_scr)

    # ---- Flash update; skip KV tiles entirely above the causal frontier.
    @pl.when(ki * block_k <= qi * block_q + (block_q - 1))
    def _attend():
        kv = kv_cache[h * nk + ki]                                 # (TK, 2*d_head)
        k = kv[:, :d_head]
        v = kv[:, d_head:]
        q = q_scr[...]
        # NT matmul: contract the d_head axis of both operands (no k.T materialized).
        s = lax.dot_general(q, k, (((1,), (1,)), ((), ())),
                            preferred_element_type=jnp.float32)    # (TQ, TK)

        row = qi * block_q + lax.broadcasted_iota(jnp.int32, (block_q, block_k), 0)
        col = ki * block_k + lax.broadcasted_iota(jnp.int32, (block_q, block_k), 1)
        s = jnp.where(col <= row, s, MASK_VALUE)

        m_prev = m_scr[...]
        m_new = jnp.maximum(m_prev, jnp.max(s, axis=-1, keepdims=True))
        alpha = jnp.exp(m_prev - m_new)
        p = jnp.exp(s - m_new)
        l_scr[...] = alpha * l_scr[...] + jnp.sum(p, axis=-1, keepdims=True)
        acc_scr[...] = alpha * acc_scr[...] + jnp.dot(
            p.astype(operand_dtype), v, preferred_element_type=jnp.float32)
        m_scr[...] = m_new

    # ---- Per-head epilogue: deferred normalization ((TQ, d_head) instead of (T, T))
    #      and accumulation of this head's slice of the output projection.
    @pl.when(ki == nk - 1)
    def _proj_head():
        z = acc_scr[...] / l_scr[...]                              # (TQ, d_head)
        out_scr[...] += jnp.dot(z.astype(operand_dtype), wo_ref[0],
                                preferred_element_type=jnp.float32)

    @pl.when(jnp.logical_and(h == num_heads - 1, ki == nk - 1))
    def _finalize():
        o_ref[0] = (out_scr[...] + bo_ref[...]).astype(o_ref.dtype)


def multi_head_attention(x, wq, wk, wv, wo, bo, *, num_heads,
                         block_q=None, block_k=None):
    B, T, d_in = x.shape
    d_out = wq.shape[1]
    assert d_out % num_heads == 0
    d_head = d_out // num_heads
    if block_q is None:
        block_q = min(T, 128)
    if block_k is None:
        block_k = min(T, 128)
    assert T % block_q == 0 and T % block_k == 0
    nq, nk = T // block_q, T // block_k

    # Host-side weight re-layout: head-major, so per-head weight tiles are legal
    # BlockSpecs (last block dim == full dim) and no in-kernel transposes are needed.
    wq_h = wq.reshape(d_in, num_heads, d_head).transpose(1, 0, 2)    # (H, d_in, dh)
    wk_h = wk.reshape(d_in, num_heads, d_head).transpose(1, 0, 2)
    wv_h = wv.reshape(d_in, num_heads, d_head).transpose(1, 0, 2)
    wkv_h = jnp.concatenate([wk_h, wv_h], axis=-1)                   # (H, d_in, 2*dh)  K|V fused
    wo_h = wo.reshape(num_heads, d_head, d_out)                      # (H, dh, d_out)
    bo = bo.reshape(1, d_out)

    kernel = functools.partial(
        mha_flash_kernel, d_head=d_head, block_q=block_q, block_k=block_k,
        operand_dtype=x.dtype)

    grid = (B, nq, num_heads, nk)
    return pl.pallas_call(
        kernel,
        out_shape=jax.ShapeDtypeStruct((B, T, d_out), x.dtype),
        grid=grid,
        in_specs=[
            # x for Q: one block per q-tile (constant across h / kv steps -> no re-DMA).
            pl.BlockSpec((1, block_q, d_in), lambda b, qi, h, ki: (b, qi, 0)),
            # x for K/V: only consumed while qi == 0 (cache fill); pin the block index
            # afterwards so it is not pointlessly re-DMA'd on every later step.
            pl.BlockSpec((1, block_k, d_in),
                         lambda b, qi, h, ki: (b, jnp.where(qi == 0, ki, 0), 0)),
            pl.BlockSpec((1, d_in, d_head), lambda b, qi, h, ki: (h, 0, 0)),      # W_q[h]
            pl.BlockSpec((1, d_in, 2 * d_head), lambda b, qi, h, ki: (h, 0, 0)),  # W_kv[h]
            pl.BlockSpec((1, d_head, d_out), lambda b, qi, h, ki: (h, 0, 0)),     # W_o[h]
            pl.BlockSpec((1, d_out), lambda b, qi, h, ki: (0, 0)),                # b_o
        ],
        out_specs=pl.BlockSpec((1, block_q, d_out), lambda b, qi, h, ki: (b, qi, 0)),
        scratch_shapes=[
            pltpu.VMEM((num_heads * nk, block_k, 2 * d_head), x.dtype),  # K|V cache
            pltpu.VMEM((block_q, d_head), x.dtype),                      # scaled Q tile
            pltpu.VMEM((block_q, 1), jnp.float32),                       # running max
            pltpu.VMEM((block_q, 1), jnp.float32),                       # running denom
            pltpu.VMEM((block_q, d_head), jnp.float32),                  # unnormalized acc
            pltpu.VMEM((block_q, d_out), jnp.float32),                   # out-proj accumulator
        ],
        compiler_params=pltpu.CompilerParams(
            # q-tile / head axes must stay sequential: the VMEM K/V cache is filled at
            # qi == 0 and the output projection accumulates across heads.  The batch
            # axis is the megacore-parallel axis.
            dimension_semantics=("parallel", "arbitrary", "arbitrary", "arbitrary"),
        ),
    )(x, x, wq_h, wkv_h, wo_h, bo)


def reference_mha(x, wq, wk, wv, wo, bo, *, num_heads):
    """Pure-JAX reference mirroring the PyTorch forward."""
    B, T, d_in = x.shape
    d_out = wq.shape[1]
    d_head = d_out // num_heads
    q = (x @ wq).reshape(B, T, num_heads, d_head).transpose(0, 2, 1, 3)
    k = (x @ wk).reshape(B, T, num_heads, d_head).transpose(0, 2, 1, 3)
    v = (x @ wv).reshape(B, T, num_heads, d_head).transpose(0, 2, 1, 3)
    s = q @ k.transpose(0, 1, 3, 2)
    mask = jnp.triu(jnp.ones((T, T), dtype=bool), k=1)
    s = jnp.where(mask[None, None], -jnp.inf, s)
    w = jax.nn.softmax(s / (d_head ** 0.5), axis=-1)
    z = (w @ v).transpose(0, 2, 1, 3).reshape(B, T, d_out)
    return z @ wo + bo.reshape(1, d_out)


if __name__ == "__main__":
    # Small shapes consistent with the module; tiles chosen so the flash structure
    # (causal tile skip, KV-cache reuse across q-tiles, multi-head accumulation)
    # is actually exercised: T=32 with 16x16 tiles -> grid (2, 2, 4, 2).
    B, T = 2, 32
    d_in, d_out = 32, 64
    num_heads = 4

    key = jax.random.PRNGKey(0)
    kx, kq, kk, kv, ko, kb = jax.random.split(key, 6)

    x = jax.random.normal(kx, (B, T, d_in), dtype=jnp.float32)
    # nn.Linear weights are (d_out, d_in); we store the transpose (d_in, d_out).
    wq = jax.random.normal(kq, (d_in, d_out), dtype=jnp.float32) * 0.1
    wk = jax.random.normal(kk, (d_in, d_out), dtype=jnp.float32) * 0.1
    wv = jax.random.normal(kv, (d_in, d_out), dtype=jnp.float32) * 0.1
    wo = jax.random.normal(ko, (d_out, d_out), dtype=jnp.float32) * 0.1
    bo = jax.random.normal(kb, (1, d_out), dtype=jnp.float32) * 0.1

    out = multi_head_attention(x, wq, wk, wv, wo, bo, num_heads=num_heads,
                               block_q=16, block_k=16)
    out = jax.block_until_ready(out)

    ref = reference_mha(x, wq, wk, wv, wo, bo, num_heads=num_heads)
    assert out.shape == (B, T, d_out)
    assert jnp.allclose(out, ref, atol=1e-3, rtol=1e-3), \
        float(jnp.max(jnp.abs(out - ref)))

    print("KERNEL_OK")
</pallas_src>

<mosaic_0001>
module attributes {stable_mosaic.version = 11 : i64} {
  func.func @mha_flash_kernel(%arg0: i32, %arg1: i32, %arg2: i32, %arg3: i32, %arg4: memref<1x16x32xf32, #tpu.memory_space<vmem>>, %arg5: memref<1x16x32xf32, #tpu.memory_space<vmem>>, %arg6: memref<1x32x16xf32, #tpu.memory_space<vmem>>, %arg7: memref<1x32x32xf32, #tpu.memory_space<vmem>>, %arg8: memref<1x16x64xf32, #tpu.memory_space<vmem>>, %arg9: memref<1x64xf32, #tpu.memory_space<vmem>>, %arg10: memref<1x16x64xf32, #tpu.memory_space<vmem>>, %arg11: memref<8x16x32xf32, #tpu.memory_space<vmem>>, %arg12: memref<16x16xf32, #tpu.memory_space<vmem>>, %arg13: memref<16x1xf32, #tpu.memory_space<vmem>>, %arg14: memref<16x1xf32, #tpu.memory_space<vmem>>, %arg15: memref<16x16xf32, #tpu.memory_space<vmem>>, %arg16: memref<16x64xf32, #tpu.memory_space<vmem>>) attributes {dimension_semantics = [#tpu.dimension_semantics<parallel>, #tpu.dimension_semantics<arbitrary>, #tpu.dimension_semantics<arbitrary>, #tpu.dimension_semantics<arbitrary>], iteration_bounds = array<i64: 2, 2, 4, 2>, scalar_prefetch = 0 : i64, scratch_operands = 6 : i64, tpu.core_type = #tpu.core_type<tc>, window_params = [{transform_indices = @transform_0, window_bounds = array<i64: 1, 16, 32>}, {transform_indices = @transform_1, window_bounds = array<i64: 1, 16, 32>}, {transform_indices = @transform_2, window_bounds = array<i64: 1, 32, 16>}, {transform_indices = @transform_3, window_bounds = array<i64: 1, 32, 32>}, {transform_indices = @transform_4, window_bounds = array<i64: 1, 16, 64>}, {pipeline_mode = #tpu.pipeline_mode<synchronous>, transform_indices = @transform_5, window_bounds = array<i64: 1, 64>}, {transform_indices = @transform_6, window_bounds = array<i64: 1, 16, 64>}]} {
    %c0_i32 = arith.constant 0 : i32
    %0 = arith.cmpi eq, %arg1, %c0_i32 : i32
    %1 = arith.extui %0 : i1 to i32
    %c0_i32_0 = arith.constant 0 : i32
    %2 = arith.cmpi ne, %1, %c0_i32_0 : i32
    scf.if %2 {
      %c0 = arith.constant 0 : index
      %c0_11 = arith.constant 0 : index
      %c0_12 = arith.constant 0 : index
      %25 = vector.load %arg5[%c0, %c0_11, %c0_12] : memref<1x16x32xf32, #tpu.memory_space<vmem>>, vector<1x16x32xf32>
      %26 = vector.shape_cast %25 : vector<1x16x32xf32> to vector<16x32xf32>
      %c0_13 = arith.constant 0 : index
      %c0_14 = arith.constant 0 : index
      %c0_15 = arith.constant 0 : index
      %27 = vector.load %arg7[%c0_13, %c0_14, %c0_15] : memref<1x32x32xf32, #tpu.memory_space<vmem>>, vector<1x32x32xf32>
      %28 = vector.shape_cast %27 : vector<1x32x32xf32> to vector<32x32xf32>
      %cst = arith.constant dense<0.000000e+00> : vector<16x32xf32>
      %29 = tpu.matmul %26, %28, %cst {dimension_numbers = #tpu.dot_dimension_numbers<[1], [0], [0], [1], [0, 0, 1, 1], [], []>} : vector<16x32xf32>, vector<32x32xf32>, vector<16x32xf32> -> vector<16x32xf32>
      %c2_i32 = arith.constant 2 : i32
      %30 = arith.muli %arg2, %c2_i32 : i32
      %31 = arith.addi %30, %arg3 : i32
      %32 = arith.index_cast %31 : i32 to index
      %c0_16 = arith.constant 0 : index
      %c0_17 = arith.constant 0 : index
      %33 = vector.load %arg11[%32, %c0_16, %c0_17] : memref<8x16x32xf32, #tpu.memory_space<vmem>>, vector<1x16x32xf32>
      %34 = vector.shape_cast %33 : vector<1x16x32xf32> to vector<16x32xf32>
      %35 = vector.shape_cast %29 : vector<16x32xf32> to vector<1x16x32xf32>
      tpu.vector_store %arg11[%32, %c0_16, %c0_17], %35 {strides = array<i32>} : memref<8x16x32xf32, #tpu.memory_space<vmem>>, vector<1x16x32xf32>,
    } else {
    }
    %c0_i32_1 = arith.constant 0 : i32
    %3 = arith.cmpi eq, %arg3, %c0_i32_1 : i32
    %4 = arith.extui %3 : i1 to i32
    %c0_i32_2 = arith.constant 0 : i32
    %5 = arith.cmpi ne, %4, %c0_i32_2 : i32
    scf.if %5 {
      %c0 = arith.constant 0 : index
      %c0_11 = arith.constant 0 : index
      %c0_12 = arith.constant 0 : index
      %25 = vector.load %arg4[%c0, %c0_11, %c0_12] : memref<1x16x32xf32, #tpu.memory_space<vmem>>, vector<1x16x32xf32>
      %26 = vector.shape_cast %25 : vector<1x16x32xf32> to vector<16x32xf32>
      %c0_13 = arith.constant 0 : index
      %c0_14 = arith.constant 0 : index
      %c0_15 = arith.constant 0 : index
      %27 = vector.load %arg6[%c0_13, %c0_14, %c0_15] : memref<1x32x16xf32, #tpu.memory_space<vmem>>, vector<1x32x16xf32>
      %28 = vector.shape_cast %27 : vector<1x32x16xf32> to vector<32x16xf32>
      %cst = arith.constant dense<0.000000e+00> : vector<16x16xf32>
      %29 = tpu.matmul %26, %28, %cst {dimension_numbers = #tpu.dot_dimension_numbers<[1], [0], [0], [1], [0, 0, 1, 1], [], []>} : vector<16x32xf32>, vector<32x16xf32>, vector<16x16xf32> -> vector<16x16xf32>
      %cst_16 = arith.constant 2.500000e-01 : f32
      %30 = vector.broadcast %cst_16 : f32 to vector<16x16xf32>
      %31 = arith.mulf %29, %30 : vector<16x16xf32>
      %c0_17 = arith.constant 0 : index
      %c0_18 = arith.constant 0 : index
      %32 = vector.load %arg12[%c0_17, %c0_18] : memref<16x16xf32, #tpu.memory_space<vmem>>, vector<16x16xf32>
      tpu.vector_store %arg12[%c0_17, %c0_18], %31 {strides = array<i32>} : memref<16x16xf32, #tpu.memory_space<vmem>>, vector<16x16xf32>,
      %cst_19 = arith.constant -1.000000e+30 : f32
      %33 = vector.broadcast %cst_19 : f32 to vector<16x1xf32>
      %c0_20 = arith.constant 0 : index
      %c0_21 = arith.constant 0 : index
      %34 = vector.load %arg13[%c0_20, %c0_21] : memref<16x1xf32, #tpu.memory_space<vmem>>, vector<16x1xf32>
      tpu.vector_store %arg13[%c0_20, %c0_21], %33 {strides = array<i32>} : memref<16x1xf32, #tpu.memory_space<vmem>>, vector<16x1xf32>,
      %cst_22 = arith.constant 0.000000e+00 : f32
      %35 = vector.broadcast %cst_22 : f32 to vector<16x1xf32>
      %c0_23 = arith.constant 0 : index
      %c0_24 = arith.constant 0 : index
      %36 = vector.load %arg14[%c0_23, %c0_24] : memref<16x1xf32, #tpu.memory_space<vmem>>, vector<16x1xf32>
      tpu.vector_store %arg14[%c0_23, %c0_24], %35 {strides = array<i32>} : memref<16x1xf32, #tpu.memory_space<vmem>>, vector<16x1xf32>,
      %cst_25 = arith.constant 0.000000e+00 : f32
      %37 = vector.broadcast %cst_25 : f32 to vector<16x16xf32>
      %c0_26 = arith.constant 0 : index
      %c0_27 = arith.constant 0 : index
      %38 = vector.load %arg15[%c0_26, %c0_27] : memref<16x16xf32, #tpu.memory_space<vmem>>, vector<16x16xf32>
      tpu.vector_store %arg15[%c0_26, %c0_27], %37 {strides = array<i32>} : memref<16x16xf32, #tpu.memory_space<vmem>>, vector<16x16xf32>,
    } else {
    }
    %c0_i32_3 = arith.constant 0 : i32
    %6 = arith.cmpi eq, %arg2, %c0_i32_3 : i32
    %c0_i32_4 = arith.constant 0 : i32
    %7 = arith.cmpi eq, %arg3, %c0_i32_4 : i32
    %8 = arith.andi %6, %7 : i1
    %9 = arith.extui %8 : i1 to i32
    %c0_i32_5 = arith.constant 0 : i32
    %10 = arith.cmpi ne, %9, %c0_i32_5 : i32
    scf.if %10 {
      %cst = arith.constant 0.000000e+00 : f32
      %25 = vector.broadcast %cst : f32 to vector<16x64xf32>
      %c0 = arith.constant 0 : index
      %c0_11 = arith.constant 0 : index
      %26 = vector.load %arg16[%c0, %c0_11] : memref<16x64xf32, #tpu.memory_space<vmem>>, vector<16x64xf32>
      tpu.vector_store %arg16[%c0, %c0_11], %25 {strides = array<i32>} : memref<16x64xf32, #tpu.memory_space<vmem>>, vector<16x64xf32>,
    } else {
    }
    %c16_i32 = arith.constant 16 : i32
    %11 = arith.muli %arg3, %c16_i32 : i32
    %c16_i32_6 = arith.constant 16 : i32
    %12 = arith.muli %arg1, %c16_i32_6 : i32
    %c15_i32 = arith.constant 15 : i32
    %13 = arith.addi %12, %c15_i32 : i32
    %14 = arith.cmpi sle, %11, %13 : i32
    %15 = arith.extui %14 : i1 to i32
    %c0_i32_7 = arith.constant 0 : i32
    %16 = arith.cmpi ne, %15, %c0_i32_7 : i32
    scf.if %16 {
      %c2_i32 = arith.constant 2 : i32
      %25 = arith.muli %arg2, %c2_i32 : i32
      %26 = arith.addi %25, %arg3 : i32
      %27 = arith.index_cast %26 : i32 to index
      %c0 = arith.constant 0 : index
      %c0_11 = arith.constant 0 : index
      %28 = vector.load %arg11[%27, %c0, %c0_11] : memref<8x16x32xf32, #tpu.memory_space<vmem>>, vector<1x16x32xf32>
      %29 = vector.shape_cast %28 : vector<1x16x32xf32> to vector<16x32xf32>
      %30 = vector.extract_strided_slice %29 {offsets = [0, 0], sizes = [16, 16], strides = [1, 1]} : vector<16x32xf32> to vector<16x16xf32>
      %31 = vector.extract_strided_slice %29 {offsets = [0, 16], sizes = [16, 16], strides = [1, 1]} : vector<16x32xf32> to vector<16x16xf32>
      %c0_12 = arith.constant 0 : index
      %c0_13 = arith.constant 0 : index
      %32 = vector.load %arg12[%c0_12, %c0_13] : memref<16x16xf32, #tpu.memory_space<vmem>>, vector<16x16xf32>
      %cst = arith.constant dense<0.000000e+00> : vector<16x16xf32>
      %33 = tpu.matmul %32, %30, %cst {dimension_numbers = #tpu.dot_dimension_numbers<[1], [1], [0], [0], [0, 0, 1, 0], [], []>} : vector<16x16xf32>, vector<16x16xf32>, vector<16x16xf32> -> vector<16x16xf32>
      %c16_i32_14 = arith.constant 16 : i32
      %34 = arith.muli %arg1, %c16_i32_14 : i32
      %35 = tpu.iota {dimensions = array<i32: 0>} : vector<16x16xi32>
      %36 = vector.broadcast %34 : i32 to vector<16x16xi32>
      %37 = arith.addi %36, %35 : vector<16x16xi32>
      %c16_i32_15 = arith.constant 16 : i32
      %38 = arith.muli %arg3, %c16_i32_15 : i32
      %39 = tpu.iota {dimensions = array<i32: 1>} : vector<16x16xi32>
      %40 = vector.broadcast %38 : i32 to vector<16x16xi32>
      %41 = arith.addi %40, %39 : vector<16x16xi32>
      %42 = arith.cmpi sle, %41, %37 : vector<16x16xi32>
      %cst_16 = arith.constant -1.000000e+30 : f32
      %43 = vector.broadcast %cst_16 : f32 to vector<16x16xf32>
      %44 = arith.select %42, %33, %43 : vector<16x16xi1>, vector<16x16xf32>
      %c0_17 = arith.constant 0 : index
      %c0_18 = arith.constant 0 : index
      %45 = vector.load %arg13[%c0_17, %c0_18] : memref<16x1xf32, #tpu.memory_space<vmem>>, vector<16x1xf32>
      %cst_19 = arith.constant dense<0xFF800000> : vector<16xf32>
      %46 = vector.multi_reduction <maximumf>, %44, %cst_19 [1] : vector<16x16xf32> to vector<16xf32>
      %47 = vector.shape_cast %46 : vector<16xf32> to vector<16x1xf32>
      %48 = arith.maximumf %45, %47 : vector<16x1xf32>
      %49 = arith.subf %45, %48 : vector<16x1xf32>
      %50 = math.exp %49 : vector<16x1xf32>
      %51 = vector.broadcast %48 : vector<16x1xf32> to vector<16x16xf32>
      %52 = arith.subf %44, %51 : vector<16x16xf32>
      %53 = math.exp %52 : vector<16x16xf32>
      %c0_20 = arith.constant 0 : index
      %c0_21 = arith.constant 0 : index
      %54 = vector.load %arg14[%c0_20, %c0_21] : memref<16x1xf32, #tpu.memory_space<vmem>>, vector<16x1xf32>
      %55 = arith.mulf %50, %54 : vector<16x1xf32>
      %cst_22 = arith.constant dense<0.000000e+00> : vector<16xf32>
      %56 = vector.multi_reduction <add>, %53, %cst_22 [1] : vector<16x16xf32> to vector<16xf32>
      %57 = vector.shape_cast %56 : vector<16xf32> to vector<16x1xf32>
      %58 = arith.addf %55, %57 : vector<16x1xf32>
      %c0_23 = arith.constant 0 : index
      %c0_24 = arith.constant 0 : index
      %59 = vector.load %arg14[%c0_23, %c0_24] : memref<16x1xf32, #tpu.memory_space<vmem>>, vector<16x1xf32>
      tpu.vector_store %arg14[%c0_23, %c0_24], %58 {strides = array<i32>} : memref<16x1xf32, #tpu.memory_space<vmem>>, vector<16x1xf32>,
      %c0_25 = arith.constant 0 : index
      %c0_26 = arith.constant 0 : index
      %60 = vector.load %arg15[%c0_25, %c0_26] : memref<16x16xf32, #tpu.memory_space<vmem>>, vector<16x16xf32>
      %61 = vector.broadcast %50 : vector<16x1xf32> to vector<16x16xf32>
      %62 = arith.mulf %61, %60 : vector<16x16xf32>
      %cst_27 = arith.constant dense<0.000000e+00> : vector<16x16xf32>
      %63 = tpu.matmul %53, %31, %cst_27 {dimension_numbers = #tpu.dot_dimension_numbers<[1], [0], [0], [1], [0, 0, 1, 1], [], []>} : vector<16x16xf32>, vector<16x16xf32>, vector<16x16xf32> -> vector<16x16xf32>
      %64 = arith.addf %62, %63 : vector<16x16xf32>
      %c0_28 = arith.constant 0 : index
      %c0_29 = arith.constant 0 : index
      %65 = vector.load %arg15[%c0_28, %c0_29] : memref<16x16xf32, #tpu.memory_space<vmem>>, vector<16x16xf32>
      tpu.vector_store %arg15[%c0_28, %c0_29], %64 {strides = array<i32>} : memref<16x16xf32, #tpu.memory_space<vmem>>, vector<16x16xf32>,
      %c0_30 = arith.constant 0 : index
      %c0_31 = arith.constant 0 : index
      %66 = vector.load %arg13[%c0_30, %c0_31] : memref<16x1xf32, #tpu.memory_space<vmem>>, vector<16x1xf32>
      tpu.vector_store %arg13[%c0_30, %c0_31], %48 {strides = array<i32>} : memref<16x1xf32, #tpu.memory_space<vmem>>, vector<16x1xf32>,
    } else {
    }
    %c1_i32 = arith.constant 1 : i32
    %17 = arith.cmpi eq, %arg3, %c1_i32 : i32
    %18 = arith.extui %17 : i1 to i32
    %c0_i32_8 = arith.constant 0 : i32
    %19 = arith.cmpi ne, %18, %c0_i32_8 : i32
    scf.if %19 {
      %c0 = arith.constant 0 : index
      %c0_11 = arith.constant 0 : index
      %25 = vector.load %arg15[%c0, %c0_11] : memref<16x16xf32, #tpu.memory_space<vmem>>, vector<16x16xf32>
      %c0_12 = arith.constant 0 : index
      %c0_13 = arith.constant 0 : index
      %26 = vector.load %arg14[%c0_12, %c0_13] : memref<16x1xf32, #tpu.memory_space<vmem>>, vector<16x1xf32>
      %27 = vector.broadcast %26 : vector<16x1xf32> to vector<16x16xf32>
      %28 = arith.divf %25, %27 : vector<16x16xf32>
      %c0_14 = arith.constant 0 : index
      %c0_15 = arith.constant 0 : index
      %29 = vector.load %arg16[%c0_14, %c0_15] : memref<16x64xf32, #tpu.memory_space<vmem>>, vector<16x64xf32>
      %c0_16 = arith.constant 0 : index
      %c0_17 = arith.constant 0 : index
      %c0_18 = arith.constant 0 : index
      %30 = vector.load %arg8[%c0_16, %c0_17, %c0_18] : memref<1x16x64xf32, #tpu.memory_space<vmem>>, vector<1x16x64xf32>
      %31 = vector.shape_cast %30 : vector<1x16x64xf32> to vector<16x64xf32>
      %cst = arith.constant dense<0.000000e+00> : vector<16x64xf32>
      %32 = tpu.matmul %28, %31, %cst {dimension_numbers = #tpu.dot_dimension_numbers<[1], [0], [0], [1], [0, 0, 1, 1], [], []>} : vector<16x16xf32>, vector<16x64xf32>, vector<16x64xf32> -> vector<16x64xf32>
      %33 = arith.addf %29, %32 : vector<16x64xf32>
      %c0_19 = arith.constant 0 : index
      %c0_20 = arith.constant 0 : index
      %34 = vector.load %arg16[%c0_19, %c0_20] : memref<16x64xf32, #tpu.memory_space<vmem>>, vector<16x64xf32>
      tpu.vector_store %arg16[%c0_19, %c0_20], %33 {strides = array<i32>} : memref<16x64xf32, #tpu.memory_space<vmem>>, vector<16x64xf32>,
    } else {
    }
    %c3_i32 = arith.constant 3 : i32
    %20 = arith.cmpi eq, %arg2, %c3_i32 : i32
    %c1_i32_9 = arith.constant 1 : i32
    %21 = arith.cmpi eq, %arg3, %c1_i32_9 : i32
    %22 = arith.andi %20, %21 : i1
    %23 = arith.extui %22 : i1 to i32
    %c0_i32_10 = arith.constant 0 : i32
    %24 = arith.cmpi ne, %23, %c0_i32_10 : i32
    scf.if %24 {
      %c0 = arith.constant 0 : index
      %c0_11 = arith.constant 0 : index
      %25 = vector.load %arg16[%c0, %c0_11] : memref<16x64xf32, #tpu.memory_space<vmem>>, vector<16x64xf32>
      %c0_12 = arith.constant 0 : index
      %c0_13 = arith.constant 0 : index
      %26 = vector.load %arg9[%c0_12, %c0_13] : memref<1x64xf32, #tpu.memory_space<vmem>>, vector<1x64xf32>
      %27 = vector.broadcast %26 : vector<1x64xf32> to vector<16x64xf32>
      %28 = arith.addf %25, %27 : vector<16x64xf32>
      %c0_14 = arith.constant 0 : index
      %c0_15 = arith.constant 0 : index
      %c0_16 = arith.constant 0 : index
      %29 = vector.load %arg10[%c0_14, %c0_15, %c0_16] : memref<1x16x64xf32, #tpu.memory_space<vmem>>, vector<1x16x64xf32>
      %30 = vector.shape_cast %29 : vector<1x16x64xf32> to vector<16x64xf32>
      %31 = vector.shape_cast %28 : vector<16x64xf32> to vector<1x16x64xf32>
      tpu.vector_store %arg10[%c0_14, %c0_15, %c0_16], %31 {strides = array<i32>} : memref<1x16x64xf32, #tpu.memory_space<vmem>>, vector<1x16x64xf32>,
    } else {
    }
    return
  }
  func.func @transform_0(%arg0: i32, %arg1: i32, %arg2: i32, %arg3: i32) -> (i32, i32, i32) {
    %c0_i32 = arith.constant 0 : i32
    %c0_i32_0 = arith.constant 0 : i32
    return %arg0, %arg1, %c0_i32 : i32, i32, i32
  }
  func.func @transform_1(%arg0: i32, %arg1: i32, %arg2: i32, %arg3: i32) -> (i32, i32, i32) {
    %c0_i32 = arith.constant 0 : i32
    %0 = arith.cmpi eq, %arg1, %c0_i32 : i32
    %c0_i32_0 = arith.constant 0 : i32
    %1 = arith.select %0, %arg3, %c0_i32_0 : i32
    %c0_i32_1 = arith.constant 0 : i32
    %c0_i32_2 = arith.constant 0 : i32
    return %arg0, %1, %c0_i32_1 : i32, i32, i32
  }
  func.func @transform_2(%arg0: i32, %arg1: i32, %arg2: i32, %arg3: i32) -> (i32, i32, i32) {
    %c0_i32 = arith.constant 0 : i32
    %c0_i32_0 = arith.constant 0 : i32
    %c0_i32_1 = arith.constant 0 : i32
    return %arg2, %c0_i32, %c0_i32_0 : i32, i32, i32
  }
  func.func @transform_3(%arg0: i32, %arg1: i32, %arg2: i32, %arg3: i32) -> (i32, i32, i32) {
    %c0_i32 = arith.constant 0 : i32
    %c0_i32_0 = arith.constant 0 : i32
    %c0_i32_1 = arith.constant 0 : i32
    return %arg2, %c0_i32, %c0_i32_0 : i32, i32, i32
  }
  func.func @transform_4(%arg0: i32, %arg1: i32, %arg2: i32, %arg3: i32) -> (i32, i32, i32) {
    %c0_i32 = arith.constant 0 : i32
    %c0_i32_0 = arith.constant 0 : i32
    %c0_i32_1 = arith.constant 0 : i32
    return %arg2, %c0_i32, %c0_i32_0 : i32, i32, i32
  }
  func.func @transform_5(%arg0: i32, %arg1: i32, %arg2: i32, %arg3: i32) -> (i32, i32) {
    %c0_i32 = arith.constant 0 : i32
    %c0_i32_0 = arith.constant 0 : i32
    %c0_i32_1 = arith.constant 0 : i32
    return %c0_i32, %c0_i32_0 : i32, i32
  }
  func.func @transform_6(%arg0: i32, %arg1: i32, %arg2: i32, %arg3: i32) -> (i32, i32, i32) {
    %c0_i32 = arith.constant 0 : i32
    %c0_i32_0 = arith.constant 0 : i32
    return %arg0, %arg1, %c0_i32 : i32, i32, i32
  }
}

</mosaic_0001>

<llo_original>
// kernel: tpu_custom_call.1
$region0: #{tpu_custom_call.1}
  #allocation0 [shape = 'u32[]', space=smem, size = 0x4, offset = 0x4, fixed_abs, tag = 'smem constant byte address 0x4 - core index']
  #allocation1 [shape = 'u32[144,128]{1,0:T(1,128)}', space=vmem, size = 0x12000, scoped, tag = 'internal scratch']
  #allocation2 [shape = 'f32[8,16,32]{2,1,0:T(8,128)}', space=vmem, size = 0x10000, scoped, tag = 'scratch operand']
  #allocation3 [shape = 'f32[16,16]{1,0:T(8,128)}', space=vmem, size = 0x2000, scoped, tag = 'scratch operand']
  #allocation4 [shape = 'f32[16,1]{1,0:T(8,128)}', space=vmem, size = 0x2000, scoped, tag = 'scratch operand']
  #allocation5 [shape = 'f32[16,1]{1,0:T(8,128)}', space=vmem, size = 0x2000, scoped, tag = 'scratch operand']
  #allocation6 [shape = 'f32[16,16]{1,0:T(8,128)}', space=vmem, size = 0x2000, scoped, tag = 'scratch operand']
  #allocation7 [shape = 'f32[16,64]{1,0:T(8,128)}', space=vmem, size = 0x2000, scoped, tag = 'scratch operand']
  %s0 = inlined_call_operand.vmem [shape: f32[2,32,32], index: 0, kind: input, shape index: {}]
  %s1 = inlined_call_operand.hbm [shape: f32[2,32,32], index: 1, kind: input, shape index: {}]
  %s2 = inlined_call_operand.vmem [shape: f32[4,32,16], index: 2, kind: input, shape index: {}]
  %s3 = inlined_call_operand.vmem [shape: f32[4,32,32], index: 3, kind: input, shape index: {}]
  %s4 = inlined_call_operand.hbm [shape: f32[4,16,64], index: 4, kind: input, shape index: {}]
  %s5 = inlined_call_operand.vmem [shape: f32[1,64], index: 5, kind: input, shape index: {}]
  %s6 = inlined_call_operand.hbm [shape: f32[2,32,64], index: 6, kind: output, shape index: {}]
  %s7 = sld [smem:[#allocation0]]
  $region89: #{tpu_custom_call.1} parent=0
    _
  %s9 = ssub.s32 1, %s7
  %s10 = scalar_select 0, %s9, %s7
  $region1: #{tpu_custom_call.1} parent=0
    #allocation8 [shape = 'u8[16384]{0}', space=vmem, size = 0x4000, scoped, tag = 'input window, operand 1']
    #allocation9 [shape = 's32[2]{0}', space=sflag, size = 0x8, scoped, tag = 'scoped memory for tpu_custom_call.1']
    #allocation10 [shape = 's32[2]{0}', space=sflag, size = 0x8, scoped, tag = 'scoped memory for tpu_custom_call.1']
    #allocation11 [shape = 'u8[16384]{0}', space=vmem, size = 0x4000, scoped, tag = 'input window, operand 4']
    #allocation12 [shape = 's32[2]{0}', space=sflag, size = 0x8, scoped, tag = 'scoped memory for tpu_custom_call.1']
    #allocation13 [shape = 'u8[16384]{0}', space=vmem, size = 0x4000, scoped, tag = 'output window, operand 0']
    %11 = vsyncpa [#allocation9], 0
    %s12 = scalar_lea.sflag [#allocation9], 1
    %13 = vsyncpa %s12, 0
    %14 = vsyncpa [#allocation12], 0
    %s15 = scalar_lea.sflag [#allocation12], 1
    %16 = vsyncpa %s15, 0
    %17 = vsyncpa [#allocation10], 0
    %s18 = scalar_lea.sflag [#allocation10], 1
    %19 = vsyncpa %s18, 0
    loop: start=0, step=1, limit=34
    $region2: #{tpu_custom_call.1} parent=1 // loop_pre_header
      _
    $region3: #{tpu_custom_call.1} parent=1 // loop_header
      %s21 = sphi 0, %s25
      %p22 = scmp.ge.s32.totalorder %s21, 34
      %s28 = sphi 0, %s54
      %s29 = sphi 0, %s50
      %s30 = sphi 0, %s46
      %s31 = sphi 0, %s42
      %s32 = sphi 0, %s28
      %s33 = sphi 0, %s29
      %s34 = sphi 0, %s30
      %s35 = sphi 0, %s31
      %s36 = sphi 0, %s32
      %s37 = sphi 0, %s33
      %s38 = sphi 0, %s34
      %s39 = sphi 0, %s35
      %s59 = sphi 0, %s61
      %s62 = sphi 0, %s59
      %s63 = sphi 0, %s62
      %s79 = sphi 0, %s63
      %s91 = sphi 0, %s93
      %s94 = sphi 0, %s91
      %s95 = sphi 0, %s94
      %s111 = sphi 0, %s95
      %s117 = sphi 0, %s119
      %s120 = sphi 0, %s117
      %s121 = sphi 0, %s120
      %s137 = sphi 0, %s121
      %s143 = sphi 0, %s145
      %s146 = sphi 0, %s143
      %s147 = sphi 0, %s146
      %s163 = sphi 0, %s147
      %s169 = sphi 0, %s171
      %s172 = sphi 0, %s169
      %s173 = sphi 0, %s172
      %s189 = sphi 0, %s173
      %s193 = sphi 0, %s193
      %s195 = sphi 0, %s193
      %s196 = sphi 0, %s195
      %s210 = sphi 0, %s196
      %s218 = sphi 0, %s220
      %s221 = sphi 0, %s218
      %s222 = sphi 0, %s221
      %s238 = sphi 0, %s222
    $region4: #{tpu_custom_call.1} parent=1 // loop_header_branch
      %24 = sbr.rel (%p22) target = $region8
    $region5: #{tpu_custom_call.1} parent=1 // loop_body
      %s26 = ssub.s32 %s21, 1
      %s27 = ssub.s32 %s21, 2
      %s40 = sadd.s32 1, %s31
      %p41 = scmp.ge.s32.totalorder %s40, 2
      %s42 = scalar_select %p41, 0, %s40
      %s43 = sadd.s32 1, %s30
      %s44 = scalar_select %p41, %s43, %s30
      %p45 = scmp.ge.s32.totalorder %s44, 4
      %s46 = scalar_select %p45, 0, %s44
      %s47 = sadd.s32 1, %s29
      %s48 = scalar_select %p45, %s47, %s29
      %p49 = scmp.ge.s32.totalorder %s48, 2
      %s50 = scalar_select %p49, 0, %s48
      %s51 = sadd.s32 1, %s28
      %s52 = scalar_select %p49, %s51, %s28
      %p53 = scmp.ge.s32.totalorder %s52, 2
      %s54 = scalar_select %p53, 0, %s52
      %s55 = ssub.s32 %s28, %s54
      %s56 = ssub.s32 %s29, %s50
      %s57 = sor.u32 %s55, %s56
      %p58 = scmp.eq.s32.totalorder %s57, 0
      %s60 = sadd.s32 %s59, 1
      %s61 = scalar_select %p58, %s59, %s60
      %p64 = pneg %p58
      %p65 = scmp.eq.s32.totalorder %s21, 31
      %p66 = por %p64, %p65
      %p67 = scmp.ne.s32.totalorder %s59, %s62
      %p68 = scmp.eq.s32.totalorder %s21, 0
      %p69 = por %p67, %p68
      %p70 = scmp.ne.s32.totalorder %s59, %s62
      %p71 = scmp.eq.s32.totalorder %s26, 31
      %p72 = por %p70, %p71
      %p73 = scmp.ne.s32.totalorder %s62, %s63
      %p74 = scmp.eq.s32.totalorder %s26, 0
      %p75 = por %p73, %p74
      %p76 = scmp.ne.s32.totalorder %s62, %s63
      %p77 = scmp.eq.s32.totalorder %s27, 31
      %p78 = por %p76, %p77
      %p80 = scmp.ne.s32.totalorder %s63, %s79
      %p81 = scmp.eq.s32.totalorder %s27, 0
      %p82 = por %p80, %p81
      %p83 = scmp.eq.s32.totalorder %s29, 0
      %s84 = scalar_select %p83, %s31, 0
      %p85 = scmp.eq.s32.totalorder %s50, 0
      %s86 = scalar_select %p85, %s42, 0
      %s87 = ssub.s32 %s28, %s54
      %s88 = ssub.s32 %s84, %s86
      %s89 = sor.u32 %s87, %s88
      %p90 = scmp.eq.s32.totalorder %s89, 0
      %s92 = sadd.s32 %s91, 1
      %s93 = scalar_select %p90, %s91, %s92
      %p96 = pneg %p90
      %p97 = scmp.eq.s32.totalorder %s21, 31
      %p98 = por %p96, %p97
      %p99 = scmp.ne.s32.totalorder %s91, %s94
      %p100 = scmp.eq.s32.totalorder %s21, 0
      %p101 = por %p99, %p100
      %p102 = scmp.ne.s32.totalorder %s91, %s94
      %p103 = scmp.eq.s32.totalorder %s26, 31
      %p104 = por %p102, %p103
      %p105 = scmp.ne.s32.totalorder %s94, %s95
      %p106 = scmp.eq.s32.totalorder %s26, 0
      %p107 = por %p105, %p106
      %p108 = scmp.ne.s32.totalorder %s94, %s95
      %p109 = scmp.eq.s32.totalorder %s27, 31
      %p110 = por %p108, %p109
      %p112 = scmp.ne.s32.totalorder %s95, %s111
      %p113 = scmp.eq.s32.totalorder %s27, 0
      %p114 = por %p112, %p113
      %s115 = ssub.s32 %s30, %s46
      %p116 = scmp.eq.s32.totalorder %s115, 0
      %s118 = sadd.s32 %s117, 1
      %s119 = scalar_select %p116, %s117, %s118
      %p122 = pneg %p116
      %p123 = scmp.eq.s32.totalorder %s21, 31
      %p124 = por %p122, %p123
      %p125 = scmp.ne.s32.totalorder %s117, %s120
      %p126 = scmp.eq.s32.totalorder %s21, 0
      %p127 = por %p125, %p126
      %p128 = scmp.ne.s32.totalorder %s117, %s120
      %p129 = scmp.eq.s32.totalorder %s26, 31
      %p130 = por %p128, %p129
      %p131 = scmp.ne.s32.totalorder %s120, %s121
      %p132 = scmp.eq.s32.totalorder %s26, 0
      %p133 = por %p131, %p132
      %p134 = scmp.ne.s32.totalorder %s120, %s121
      %p135 = scmp.eq.s32.totalorder %s27, 31
      %p136 = por %p134, %p135
      %p138 = scmp.ne.s32.totalorder %s121, %s137
      %p139 = scmp.eq.s32.totalorder %s27, 0
      %p140 = por %p138, %p139
      %s141 = ssub.s32 %s30, %s46
      %p142 = scmp.eq.s32.totalorder %s141, 0
      %s144 = sadd.s32 %s143, 1
      %s145 = scalar_select %p142, %s143, %s144
      %p148 = pneg %p142
      %p149 = scmp.eq.s32.totalorder %s21, 31
      %p150 = por %p148, %p149
      %p151 = scmp.ne.s32.totalorder %s143, %s146
      %p152 = scmp.eq.s32.totalorder %s21, 0
      %p153 = por %p151, %p152
      %p154 = scmp.ne.s32.totalorder %s143, %s146
      %p155 = scmp.eq.s32.totalorder %s26, 31
      %p156 = por %p154, %p155
      %p157 = scmp.ne.s32.totalorder %s146, %s147
      %p158 = scmp.eq.s32.totalorder %s26, 0
      %p159 = por %p157, %p158
      %p160 = scmp.ne.s32.totalorder %s146, %s147
      %p161 = scmp.eq.s32.totalorder %s27, 31
      %p162 = por %p160, %p161
      %p164 = scmp.ne.s32.totalorder %s147, %s163
      %p165 = scmp.eq.s32.totalorder %s27, 0
      %p166 = por %p164, %p165
      %s167 = ssub.s32 %s30, %s46
      %p168 = scmp.eq.s32.totalorder %s167, 0
      %s170 = sadd.s32 %s169, 1
      %s171 = scalar_select %p168, %s169, %s170
      %p174 = pneg %p168
      %p175 = scmp.eq.s32.totalorder %s21, 31
      %p176 = por %p174, %p175
      %p177 = scmp.ne.s32.totalorder %s169, %s172
      %p178 = scmp.eq.s32.totalorder %s21, 0
      %p179 = por %p177, %p178
      %p180 = scmp.ne.s32.totalorder %s169, %s172
      %p181 = scmp.eq.s32.totalorder %s26, 31
      %p182 = por %p180, %p181
      %p183 = scmp.ne.s32.totalorder %s172, %s173
      %p184 = scmp.eq.s32.totalorder %s26, 0
      %p185 = por %p183, %p184
      %p186 = scmp.ne.s32.totalorder %s172, %s173
      %p187 = scmp.eq.s32.totalorder %s27, 31
      %p188 = por %p186, %p187
      %p190 = scmp.ne.s32.totalorder %s173, %s189
      %p191 = scmp.eq.s32.totalorder %s27, 0
      %p192 = por %p190, %p191
      %s194 = sadd.s32 %s193, 1
      %p197 = scmp.eq.s32.totalorder %s21, 31
      %p198 = scmp.ne.s32.totalorder %s193, %s195
      %p199 = scmp.eq.s32.totalorder %s21, 0
      %p200 = por %p198, %p199
      %p201 = scmp.ne.s32.totalorder %s193, %s195
      %p202 = scmp.eq.s32.totalorder %s26, 31
      %p203 = por %p201, %p202
      %p204 = scmp.ne.s32.totalorder %s195, %s196
      %p205 = scmp.eq.s32.totalorder %s26, 0
      %p206 = por %p204, %p205
      %p207 = scmp.ne.s32.totalorder %s195, %s196
      %p208 = scmp.eq.s32.totalorder %s27, 31
      %p209 = por %p207, %p208
      %p211 = scmp.ne.s32.totalorder %s196, %s210
      %p212 = scmp.eq.s32.totalorder %s27, 0
      %p213 = por %p211, %p212
      %s214 = ssub.s32 %s28, %s54
      %s215 = ssub.s32 %s29, %s50
      %s216 = sor.u32 %s214, %s215
      %p217 = scmp.eq.s32.totalorder %s216, 0
      %s219 = sadd.s32 %s218, 1
      %s220 = scalar_select %p217, %s218, %s219
      %p223 = pneg %p217
      %p224 = scmp.eq.s32.totalorder %s21, 31
      %p225 = por %p223, %p224
      %p226 = scmp.ne.s32.totalorder %s218, %s221
      %p227 = scmp.eq.s32.totalorder %s21, 0
      %p228 = por %p226, %p227
      %p229 = scmp.ne.s32.totalorder %s218, %s221
      %p230 = scmp.eq.s32.totalorder %s26, 31
      %p231 = por %p229, %p230
      %p232 = scmp.ne.s32.totalorder %s221, %s222
      %p233 = scmp.eq.s32.totalorder %s26, 0
      %p234 = por %p232, %p233
      %p235 = scmp.ne.s32.totalorder %s221, %s222
      %p236 = scmp.eq.s32.totalorder %s27, 31
      %p237 = por %p235, %p236
      %p239 = scmp.ne.s32.totalorder %s222, %s238
      %p240 = scmp.eq.s32.totalorder %s27, 0
      %p241 = por %p239, %p240
      %p242 = scmp.le.s32.totalorder 1, %s21
      %p243 = scmp.lt.s32.totalorder %s21, 33
      %p244 = pnand %p242, %p243
      %p245 = pneg %p244
      // Predicated region
      $region9: #{tpu_custom_call.1} parent=5 // pred_check
        _
      $region10: #{tpu_custom_call.1} parent=5 // pred_check_branch
        %247 = sbr.rel (%p244) target = $region12
      $region11: #{tpu_custom_call.1} parent=5 // pred_region
        %s248 = ssub.s32 %s21, 1
        // Predicated region
        $region13: #{tpu_custom_call.1} parent=11 // pred_check
          %p249 = pneg %p206
        $region14: #{tpu_custom_call.1} parent=11 // pred_check_branch
          %251 = sbr.rel (%p249) target = $region16
        $region15: #{tpu_custom_call.1} parent=11 // pred_region
          _
        $region16: #{tpu_custom_call.1} parent=11 // pred_fallthru
          _
      $region12: #{tpu_custom_call.1} parent=5 // pred_fallthru
        _
      %p252 = scmp.lt.s32.totalorder %s21, 32
      // Predicated region
      $region17: #{tpu_custom_call.1} parent=5 // pred_check
        %p253 = pneg %p252
      $region18: #{tpu_custom_call.1} parent=5 // pred_check_branch
        %255 = sbr.rel (%p253) target = $region20
      $region19: #{tpu_custom_call.1} parent=5 // pred_region
        // Predicated region
        $region21: #{tpu_custom_call.1} parent=19 // pred_check
          %p256 = pneg %p69
        $region22: #{tpu_custom_call.1} parent=19 // pred_check_branch
          %258 = sbr.rel (%p256) target = $region24
        $region23: #{tpu_custom_call.1} parent=19 // pred_region
          %s259 = smul.u32 2, %s29
          %p260 = scmp.lt.s32.totalorder %s28, 1
          %s261 = scalar_select %p260, %s28, 1
          %p262 = scmp.lt.s32.totalorder %s259, 3
          %s263 = scalar_select %p262, %s259, 3
          %s264 = smul.addr %s261, 4
          %s265 = sadd.s32 %s263, %s264
          %s266 = smul.addr %s265, 8
          %s267 = scalar_lea.vmem %s0, %s266
          %s268 = smul.u32 2, %s29
        $region24: #{tpu_custom_call.1} parent=19 // pred_fallthru
          _
        // Predicated region
        $region25: #{tpu_custom_call.1} parent=19 // pred_check
          %p269 = pneg %p101
        $region26: #{tpu_custom_call.1} parent=19 // pred_check_branch
          %271 = sbr.rel (%p269) target = $region28
        $region27: #{tpu_custom_call.1} parent=19 // pred_region
          %s272 = sand.u32 %s91, 1
          %s273 = scalar_lea.sflag [#allocation9], %s272
          %s274 = sand.u32 %s91, 1
          %s275 = smul.addr %s274, 16
          %s276 = scalar_lea.vmem [#allocation8], %s275
          %p277 = scmp.eq.s32.totalorder %s29, 0
          %s278 = scalar_select %p277, %s31, 0
          %s279 = smul.u32 2, %s278
          %s281 = ssub.s32 256, 256
          %282 = vsyncadd %s273, %s281
          %s283 = smul.addr %s28, 4
          %s284 = sadd.s32 %s279, %s283
          %s285 = smul.addr %s284, 128
          %s286 = scalar_lea.hbm %s1, %s285
          %s287 = sshll.u32 %s276, 4
          %s288 = int_to_ptr.vmem [resolvable:$true] %s287
          %293 = dma.hbm_to_vmem [thread:$0]  %s286, 256, %s288, %s273, 128, 128, 8
        $region28: #{tpu_custom_call.1} parent=19 // pred_fallthru
          _
        // Predicated region
        $region29: #{tpu_custom_call.1} parent=19 // pred_check
          %p294 = pneg %p127
        $region30: #{tpu_custom_call.1} parent=19 // pred_check_branch
          %296 = sbr.rel (%p294) target = $region32
        $region31: #{tpu_custom_call.1} parent=19 // pred_region
          %p297 = scmp.lt.s32.totalorder %s30, 3
          %s298 = scalar_select %p297, %s30, 3
          %s299 = smul.addr %s298, 4
          %s300 = smul.addr %s299, 8
          %s301 = scalar_lea.vmem %s2, %s300
        $region32: #{tpu_custom_call.1} parent=19 // pred_fallthru
          _
        // Predicated region
        $region33: #{tpu_custom_call.1} parent=19 // pred_check
          %p302 = pneg %p153
        $region34: #{tpu_custom_call.1} parent=19 // pred_check_branch
          %304 = sbr.rel (%p302) target = $region36
        $region35: #{tpu_custom_call.1} parent=19 // pred_region
          %p305 = scmp.lt.s32.totalorder %s30, 3
          %s306 = scalar_select %p305, %s30, 3
          %s307 = smul.addr %s306, 4
          %s308 = smul.addr %s307, 8
          %s309 = scalar_lea.vmem %s3, %s308
        $region36: #{tpu_custom_call.1} parent=19 // pred_fallthru
          _
        // Predicated region
        $region37: #{tpu_custom_call.1} parent=19 // pred_check
          %p310 = pneg %p179
        $region38: #{tpu_custom_call.1} parent=19 // pred_check_branch
          %312 = sbr.rel (%p310) target = $region40
        $region39: #{tpu_custom_call.1} parent=19 // pred_region
          %s313 = sand.u32 %s169, 1
          %s314 = scalar_lea.sflag [#allocation12], %s313
          %s315 = sand.u32 %s169, 1
          %s316 = smul.addr %s315, 16
          %s317 = scalar_lea.vmem [#allocation11], %s316
          %s319 = ssub.s32 256, 256
          %320 = vsyncadd %s314, %s319
          %s321 = smul.addr %s30, 2
          %s322 = smul.addr %s321, 128
          %s323 = scalar_lea.hbm %s4, %s322
          %s324 = sshll.u32 %s317, 4
          %s325 = int_to_ptr.vmem [resolvable:$true] %s324
          %330 = dma.hbm_to_vmem [thread:$0]  %s323, 256, %s325, %s314, 128, 128, 8
        $region40: #{tpu_custom_call.1} parent=19 // pred_fallthru
          _
      $region20: #{tpu_custom_call.1} parent=5 // pred_fallthru
        _
      %p331 = scmp.le.s32.totalorder 1, %s21
      %p332 = scmp.lt.s32.totalorder %s21, 33
      %p333 = pnand %p331, %p332
      %p334 = pneg %p333
      // Predicated region
      $region41: #{tpu_custom_call.1} parent=5 // pred_check
        _
      $region42: #{tpu_custom_call.1} parent=5 // pred_check_branch
        %336 = sbr.rel (%p333) target = $region44
      $region43: #{tpu_custom_call.1} parent=5 // pred_region
        %s337 = ssub.s32 %s21, 1
        %s338 = sand.u32 %s94, 1
        %s339 = scalar_lea.sflag [#allocation9], %s338
        %s340 = sand.u32 %s94, 1
        %s341 = smul.addr %s340, 16
        %s342 = scalar_lea.vmem [#allocation8], %s341
        // Predicated region
        $region45: #{tpu_custom_call.1} parent=43 // pred_check
          %p343 = pneg %p107
        $region46: #{tpu_custom_call.1} parent=43 // pred_check_branch
          %345 = sbr.rel (%p343) target = $region48
        $region47: #{tpu_custom_call.1} parent=43 // pred_region
          %346 = dma.done %s339, 256
        $region48: #{tpu_custom_call.1} parent=43 // pred_fallthru
          _
        %s347 = sand.u32 %s172, 1
        %s348 = scalar_lea.sflag [#allocation12], %s347
        %s349 = sand.u32 %s172, 1
        %s350 = smul.addr %s349, 16
        %s351 = scalar_lea.vmem [#allocation11], %s350
        // Predicated region
        $region49: #{tpu_custom_call.1} parent=43 // pred_check
          %p352 = pneg %p185
        $region50: #{tpu_custom_call.1} parent=43 // pred_check_branch
          %354 = sbr.rel (%p352) target = $region52
        $region51: #{tpu_custom_call.1} parent=43 // pred_region
          %355 = dma.done %s348, 256
        $region52: #{tpu_custom_call.1} parent=43 // pred_fallthru
          _
        %s356 = smul.u32 2, %s33
        %p357 = scmp.lt.s32.totalorder %s32, 1
        %s358 = scalar_select %p357, %s32, 1
        %p359 = scmp.lt.s32.totalorder %s356, 3
        %s360 = scalar_select %p359, %s356, 3
        %s361 = smul.addr %s358, 4
        %s362 = sadd.s32 %s360, %s361
        %s363 = smul.addr %s362, 8
        %s364 = scalar_lea.vmem %s0, %s363
        %p365 = pneg %p75
        %p366 = pneg %p72
        %s367 = sand.u32 %s94, 1
        %s368 = scalar_lea.sflag [#allocation9], %s367
        %s369 = sand.u32 %s94, 1
        %s370 = smul.addr %s369, 16
        %s371 = scalar_lea.vmem [#allocation8], %s370
        %p372 = pneg %p107
        %p373 = pneg %p104
        %p374 = scmp.lt.s32.totalorder %s34, 3
        %s375 = scalar_select %p374, %s34, 3
        %s376 = smul.addr %s375, 4
        %s377 = smul.addr %s376, 8
        %s378 = scalar_lea.vmem %s2, %s377
        %p379 = pneg %p133
        %p380 = pneg %p130
        %p381 = scmp.lt.s32.totalorder %s34, 3
        %s382 = scalar_select %p381, %s34, 3
        %s383 = smul.addr %s382, 4
        %s384 = smul.addr %s383, 8
        %s385 = scalar_lea.vmem %s3, %s384
        %p386 = pneg %p159
        %p387 = pneg %p156
        %s388 = sand.u32 %s172, 1
        %s389 = scalar_lea.sflag [#allocation12], %s388
        %s390 = sand.u32 %s172, 1
        %s391 = smul.addr %s390, 16
        %s392 = scalar_lea.vmem [#allocation11], %s391
        %p393 = pneg %p185
        %p394 = pneg %p182
        %p395 = pneg %p206
        %p396 = pneg %p203
        %p397 = pneg %p234
        %p398 = pneg %p231
        %s399 = sand.u32 %s221, 1
        %s400 = scalar_lea.sflag [#allocation10], %s399
        %s401 = sand.u32 %s221, 1
        %s402 = smul.addr %s401, 16
        %s403 = scalar_lea.vmem [#allocation13], %s402
        %s404 = smul.u32 2, %s33
        %p405 = scmp.lt.s32.totalorder %s32, 1
        %s406 = scalar_select %p405, %s32, 1
        %p407 = scmp.lt.s32.totalorder %s404, 3
        %s408 = scalar_select %p407, %s404, 3
        %s409 = smul.addr %s406, 4
        %s410 = sadd.s32 %s408, %s409
        %s411 = smul.addr %s410, 8
        %s412 = scalar_lea.vmem %s0, %s411
        %s413 = smul.u32 2, %s33
        %p414 = scmp.eq.s32.totalorder %s33, 0
        %s415 = scalar_select %p414, %s35, 0
        %s416 = smul.u32 2, %s415
        %p417 = scmp.lt.s32.totalorder %s34, 3
        %s418 = scalar_select %p417, %s34, 3
        %s419 = smul.addr %s418, 4
        %s420 = smul.addr %s419, 8
        %s421 = scalar_lea.vmem %s2, %s420
        %p422 = scmp.lt.s32.totalorder %s34, 3
        %s423 = scalar_select %p422, %s34, 3
        %s424 = smul.addr %s423, 4
        %s425 = smul.addr %s424, 8
        %s426 = scalar_lea.vmem %s3, %s425
        %s427 = smul.u32 2, %s33
        %p428 = scmp.eq.s32.totalorder %s33, 0
        // Predicated region
        $region53: #{tpu_custom_call.1} parent=43 // pred_check
          %p429 = pneg %p428
        $region54: #{tpu_custom_call.1} parent=43 // pred_check_branch
          %431 = sbr.rel (%p429) target = $region56
        $region55: #{tpu_custom_call.1} parent=43 // pred_region
          %v432 = vld [vmem:[%s342] sm:$0xff]
          %v433 = vld [vmem:[%s342 + $0x8] sm:$0xff]
          %v434 = vld [vmem:[%s426] sm:$0xff]
          %v435 = vld [vmem:[%s426 + $0x8] sm:$0xff]
          %v436 = vld [vmem:[%s426 + $0x10] sm:$0xff]
          %v437 = vld [vmem:[%s426 + $0x18] sm:$0xff]
          %vm438 = vcmask 261120
          %v440 = vsel %vm438, %v432, 0
          %v443 = vsel %vm438, %v433, 0
          %445 = vmatprep.subr.mxu0 0.0
          %446 = vmatpush1.msra.mxu0 0.0
          %447 = vmatprep.subr.mxu0 0.0
          %448 = vmatpush1.msra.mxu0 0.0
          %449 = vmatprep.subr.mxu0 0.0
          %450 = vmatpush1.msra.mxu0 0.0
          %451 = vmatprep.subr.mxu0 0.0
          %452 = vmatpush1.msra.mxu0 0.0
          %453 = vmatprep.subr.mxu0 0.0
          %454 = vmatpush1.msra.mxu0 0.0
          %455 = vmatprep.subr.mxu0 0.0
          %456 = vmatpush1.msra.mxu0 0.0
          %457 = vmatprep.subr.mxu0 0.0
          %458 = vmatpush1.msra.mxu0 0.0
          %459 = vmatprep.subr.mxu0 0.0
          %460 = vmatpush1.msra.mxu0 0.0
          %461 = vmatprep.subr.mxu0 0.0
          %462 = vmatpush1.msra.mxu0 0.0
          %463 = vmatprep.subr.mxu0 0.0
          %464 = vmatpush1.msra.mxu0 0.0
          %465 = vmatprep.subr.mxu0 0.0
          %466 = vmatpush1.msra.mxu0 0.0
          %467 = vmatprep.subr.mxu0 0.0
          %468 = vmatpush1.msra.mxu0 0.0
          %469 = vmatprep.subr.mxu0 0.0
          %470 = vmatpush1.msra.mxu0 %v437
          %471 = vmatprep.subr.mxu0 0.0
          %472 = vmatpush1.msra.mxu0 %v436
          %473 = vmatprep.subr.mxu0 0.0
          %474 = vmatpush1.msra.mxu0 %v435
          %475 = vmatprep.subr.mxu0 0.0
          %476 = vmatpush1.msra.mxu0 %v434
          %477 = vmatprep.subr.mxu0 0.0
          %478 = vmatpush2.msra.mxu0 0.0
          %479 = vmatprep.subr.mxu0 0.0
          %480 = vmatpush2.msra.mxu0 0.0
          %481 = vmatprep.subr.mxu0 0.0
          %482 = vmatpush2.msra.mxu0 0.0
          %483 = vmatprep.subr.mxu0 0.0
          %484 = vmatpush2.msra.mxu0 0.0
          %485 = vmatprep.subr.mxu0 0.0
          %486 = vmatpush2.msra.mxu0 0.0
          %487 = vmatprep.subr.mxu0 0.0
          %488 = vmatpush2.msra.mxu0 0.0
          %489 = vmatprep.subr.mxu0 0.0
          %490 = vmatpush2.msra.mxu0 0.0
          %491 = vmatprep.subr.mxu0 0.0
          %492 = vmatpush2.msra.mxu0 0.0
          %493 = vmatprep.subr.mxu0 0.0
          %494 = vmatpush2.msra.mxu0 0.0
          %495 = vmatprep.subr.mxu0 0.0
          %496 = vmatpush2.msra.mxu0 0.0
          %497 = vmatprep.subr.mxu0 0.0
          %498 = vmatpush2.msra.mxu0 0.0
          %499 = vmatprep.subr.mxu0 0.0
          %500 = vmatpush2.msra.mxu0 0.0
          %501 = vmatprep.subr.mxu0 0.0
          %502 = vmatpush2.msra.mxu0 0.0
          %503 = vmatprep.subr.mxu0 0.0
          %504 = vmatpush2.msra.mxu0 0.0
          %505 = vmatprep.subr.mxu0 0.0
          %506 = vmatpush2.msra.mxu0 0.0
          %507 = vmatprep.subr.mxu0 0.0
          %508 = vmatpush2.msra.mxu0 0.0
          %509 = vmatprep.mubr.f32.mxu0 0.0
          %510 = vmatmul.mubr.f32.gmra.mxu0 %v440
          %v511 = vpop.f32.mrf.mxu0
          %v512 = vadd.f32 0.0, %v511
          %v513 = vpop.f32.mrf.mxu0
          %514 = vmatprep.mubr.f32.mxu0 0.0
          %515 = vmatmul.mubr.f32.gmra.mxu0 %v443
          %v516 = vpop.f32.mrf.mxu0
          %v517 = vadd.f32 0.0, %v516
          %v518 = vpop.f32.mrf.mxu0
          %519 = vdwg.mxu0
          %s520 = smul.u32 %s34, 2
          %s521 = sadd.s32 %s520, %s35
          %s522 = smul.u32 %s521, 16
          %s523 = scalar_lea.vmem [#allocation2], %s522
          %524 = vst.msk [vmem:[%s523] sm:$0xff] %vm438, %v512
          %525 = vst.msk [vmem:[%s523 + $0x8] sm:$0xff] %vm438, %v517
        $region56: #{tpu_custom_call.1} parent=43 // pred_fallthru
          _
        %p526 = scmp.eq.s32.totalorder %s35, 0
        // Predicated region
        $region57: #{tpu_custom_call.1} parent=43 // pred_check
          %p527 = pneg %p526
        $region58: #{tpu_custom_call.1} parent=43 // pred_check_branch
          %529 = sbr.rel (%p527) target = $region60
        $region59: #{tpu_custom_call.1} parent=43 // pred_region
          %v530 = vld [vmem:[%s412] sm:$0xff]
          %v531 = vld [vmem:[%s412 + $0x8] sm:$0xff]
          %v532 = vld [vmem:[%s421] sm:$0xff]
          %v533 = vld [vmem:[%s421 + $0x8] sm:$0xff]
          %v534 = vld [vmem:[%s421 + $0x10] sm:$0xff]
          %v535 = vld [vmem:[%s421 + $0x18] sm:$0xff]
          %vm536 = vcmask 261120
          %v538 = vsel %vm536, %v530, 0
          %v541 = vsel %vm536, %v531, 0
          %543 = vmatprep.subr.mxu0 0.0
          %544 = vmatpush1.msra.mxu0 0.0
          %545 = vmatprep.subr.mxu0 0.0
          %546 = vmatpush1.msra.mxu0 0.0
          %547 = vmatprep.subr.mxu0 0.0
          %548 = vmatpush1.msra.mxu0 0.0
          %549 = vmatprep.subr.mxu0 0.0
          %550 = vmatpush1.msra.mxu0 0.0
          %551 = vmatprep.subr.mxu0 0.0
          %552 = vmatpush1.msra.mxu0 0.0
          %553 = vmatprep.subr.mxu0 0.0
          %554 = vmatpush1.msra.mxu0 0.0
          %555 = vmatprep.subr.mxu0 0.0
          %556 = vmatpush1.msra.mxu0 0.0
          %557 = vmatprep.subr.mxu0 0.0
          %558 = vmatpush1.msra.mxu0 0.0
          %559 = vmatprep.subr.mxu0 0.0
          %560 = vmatpush1.msra.mxu0 0.0
          %561 = vmatprep.subr.mxu0 0.0
          %562 = vmatpush1.msra.mxu0 0.0
          %563 = vmatprep.subr.mxu0 0.0
          %564 = vmatpush1.msra.mxu0 0.0
          %565 = vmatprep.subr.mxu0 0.0
          %566 = vmatpush1.msra.mxu0 0.0
          %567 = vmatprep.subr.mxu0 0.0
          %568 = vmatpush1.msra.mxu0 %v535
          %569 = vmatprep.subr.mxu0 0.0
          %570 = vmatpush1.msra.mxu0 %v534
          %571 = vmatprep.subr.mxu0 0.0
          %572 = vmatpush1.msra.mxu0 %v533
          %573 = vmatprep.subr.mxu0 0.0
          %574 = vmatpush1.msra.mxu0 %v532
          %575 = vmatprep.subr.mxu0 0.0
          %576 = vmatpush2.msra.mxu0 0.0
          %577 = vmatprep.subr.mxu0 0.0
          %578 = vmatpush2.msra.mxu0 0.0
          %579 = vmatprep.subr.mxu0 0.0
          %580 = vmatpush2.msra.mxu0 0.0
          %581 = vmatprep.subr.mxu0 0.0
          %582 = vmatpush2.msra.mxu0 0.0
          %583 = vmatprep.subr.mxu0 0.0
          %584 = vmatpush2.msra.mxu0 0.0
          %585 = vmatprep.subr.mxu0 0.0
          %586 = vmatpush2.msra.mxu0 0.0
          %587 = vmatprep.subr.mxu0 0.0
          %588 = vmatpush2.msra.mxu0 0.0
          %589 = vmatprep.subr.mxu0 0.0
          %590 = vmatpush2.msra.mxu0 0.0
          %591 = vmatprep.subr.mxu0 0.0
          %592 = vmatpush2.msra.mxu0 0.0
          %593 = vmatprep.subr.mxu0 0.0
          %594 = vmatpush2.msra.mxu0 0.0
          %595 = vmatprep.subr.mxu0 0.0
          %596 = vmatpush2.msra.mxu0 0.0
          %597 = vmatprep.subr.mxu0 0.0
          %598 = vmatpush2.msra.mxu0 0.0
          %599 = vmatprep.subr.mxu0 0.0
          %600 = vmatpush2.msra.mxu0 0.0
          %601 = vmatprep.subr.mxu0 0.0
          %602 = vmatpush2.msra.mxu0 0.0
          %603 = vmatprep.subr.mxu0 0.0
          %604 = vmatpush2.msra.mxu0 0.0
          %605 = vmatprep.subr.mxu0 0.0
          %606 = vmatpush2.msra.mxu0 0.0
          %607 = vmatprep.mubr.f32.mxu0 0.0
          %608 = vmatmul.mubr.f32.gmra.mxu0 %v538
          %v609 = vpop.f32.mrf.mxu0
          %v610 = vadd.f32 0.0, %v609
          %v611 = vpop.f32.mrf.mxu0
          %612 = vmatprep.mubr.f32.mxu0 0.0
          %613 = vmatmul.mubr.f32.gmra.mxu0 %v541
          %v614 = vpop.f32.mrf.mxu0
          %v615 = vadd.f32 0.0, %v614
          %v616 = vpop.f32.mrf.mxu0
          %617 = vdwg.mxu0
          %v618 = vmul.f32 %v610, 0.25
          %v619 = vmul.f32 %v615, 0.25
          %vm620 = vcmask 130048
          %621 = vst.msk [vmem:[#allocation3] sm:$0xff] %vm620, %v618
          %622 = vst.msk [vmem:[#allocation3 + $0x8] sm:$0xff] %vm620, %v619
          %vm623 = vcmask 7168
          %624 = vst.msk [vmem:[#allocation4] sm:$0xff] %vm623, -1e+30
          %625 = vst.msk [vmem:[#allocation4 + $0x8] sm:$0xff] %vm623, -1e+30
          %626 = vst.msk [vmem:[#allocation5] sm:$0xff] %vm623, 0.0
          %627 = vst.msk [vmem:[#allocation5 + $0x8] sm:$0xff] %vm623, 0.0
          %628 = vst.msk [vmem:[#allocation6] sm:$0xff] %vm620, 0.0
          %629 = vst.msk [vmem:[#allocation6 + $0x8] sm:$0xff] %vm620, 0.0
        $region60: #{tpu_custom_call.1} parent=43 // pred_fallthru
          _
        %p630 = scmp.eq.s32.totalorder %s34, 0
        %p631 = pnand %p630, %p526
        %p632 = pneg %p631
        // Predicated region
        $region61: #{tpu_custom_call.1} parent=43 // pred_check
          _
        $region62: #{tpu_custom_call.1} parent=43 // pred_check_branch
          %634 = sbr.rel (%p631) target = $region64
        $region63: #{tpu_custom_call.1} parent=43 // pred_region
          %vm635 = vcmask 523264
          %636 = vst.msk [vmem:[#allocation7] sm:$0xff] %vm635, 0.0
          %637 = vst.msk [vmem:[#allocation7 + $0x8] sm:$0xff] %vm635, 0.0
        $region64: #{tpu_custom_call.1} parent=43 // pred_fallthru
          _
        %s638 = smul.u32 %s35, 16
        %s639 = smul.u32 %s33, 16
        %s640 = sadd.s32 %s639, 15
        %p641 = scmp.le.s32.totalorder %s638, %s640
        // Predicated region
        $region65: #{tpu_custom_call.1} parent=43 // pred_check
          %p642 = pneg %p641
        $region66: #{tpu_custom_call.1} parent=43 // pred_check_branch
          %644 = sbr.rel (%p642) target = $region68
        $region67: #{tpu_custom_call.1} parent=43 // pred_region
          %s645 = smul.u32 %s34, 2
          %s646 = sadd.s32 %s645, %s35
          %s647 = smul.u32 %s646, 16
          %s648 = scalar_lea.vmem [#allocation2], %s647
          %v649 = vld [vmem:[%s648] sm:$0xff]
          %v650 = vld [vmem:[%s648 + $0x8] sm:$0xff]
          %v651 = vld [vmem:[#allocation3] sm:$0xff]
          %v652 = vld [vmem:[#allocation3 + $0x8] sm:$0xff]
          %vm653 = vcmask 130048
          %v655 = vsel %vm653, %v651, 0
          %v658 = vsel %vm653, %v652, 0
          %v661 = vsel %vm653, %v649, 0
          %v664 = vsel %vm653, %v650, 0
          %666 = vmatprep.subr.mxu0 0.0
          %667 = vmatpush1.xpose.msra.mxu0 0.0
          %668 = vmatprep.subr.mxu0 0.0
          %669 = vmatpush1.xpose.msra.mxu0 0.0
          %670 = vmatprep.subr.mxu0 0.0
          %671 = vmatpush1.xpose.msra.mxu0 0.0
          %672 = vmatprep.subr.mxu0 0.0
          %673 = vmatpush1.xpose.msra.mxu0 0.0
          %674 = vmatprep.subr.mxu0 0.0
          %675 = vmatpush1.xpose.msra.mxu0 0.0
          %676 = vmatprep.subr.mxu0 0.0
          %677 = vmatpush1.xpose.msra.mxu0 0.0
          %678 = vmatprep.subr.mxu0 0.0
          %679 = vmatpush1.xpose.msra.mxu0 0.0
          %680 = vmatprep.subr.mxu0 0.0
          %681 = vmatpush1.xpose.msra.mxu0 0.0
          %682 = vmatprep.subr.mxu0 0.0
          %683 = vmatpush1.xpose.msra.mxu0 0.0
          %684 = vmatprep.subr.mxu0 0.0
          %685 = vmatpush1.xpose.msra.mxu0 0.0
          %686 = vmatprep.subr.mxu0 0.0
          %687 = vmatpush1.xpose.msra.mxu0 0.0
          %688 = vmatprep.subr.mxu0 0.0
          %689 = vmatpush1.xpose.msra.mxu0 0.0
          %690 = vmatprep.subr.mxu0 0.0
          %691 = vmatpush1.xpose.msra.mxu0 0.0
          %692 = vmatprep.subr.mxu0 0.0
          %693 = vmatpush1.xpose.msra.mxu0 0.0
          %694 = vmatprep.subr.mxu0 0.0
          %695 = vmatpush1.xpose.msra.mxu0 %v664
          %696 = vmatprep.subr.mxu0 0.0
          %697 = vmatpush1.xpose.msra.mxu0 %v661
          %698 = vmatprep.subr.mxu0 0.0
          %699 = vmatpush2.xpose.msra.mxu0 0.0
          %700 = vmatprep.subr.mxu0 0.0
          %701 = vmatpush2.xpose.msra.mxu0 0.0
          %702 = vmatprep.subr.mxu0 0.0
          %703 = vmatpush2.xpose.msra.mxu0 0.0
          %704 = vmatprep.subr.mxu0 0.0
          %705 = vmatpush2.xpose.msra.mxu0 0.0
          %706 = vmatprep.subr.mxu0 0.0
          %707 = vmatpush2.xpose.msra.mxu0 0.0
          %708 = vmatprep.subr.mxu0 0.0
          %709 = vmatpush2.xpose.msra.mxu0 0.0
          %710 = vmatprep.subr.mxu0 0.0
          %711 = vmatpush2.xpose.msra.mxu0 0.0
          %712 = vmatprep.subr.mxu0 0.0
          %713 = vmatpush2.xpose.msra.mxu0 0.0
          %714 = vmatprep.subr.mxu0 0.0
          %715 = vmatpush2.xpose.msra.mxu0 0.0
          %716 = vmatprep.subr.mxu0 0.0
          %717 = vmatpush2.xpose.msra.mxu0 0.0
          %718 = vmatprep.subr.mxu0 0.0
          %719 = vmatpush2.xpose.msra.mxu0 0.0
          %720 = vmatprep.subr.mxu0 0.0
          %721 = vmatpush2.xpose.msra.mxu0 0.0
          %722 = vmatprep.subr.mxu0 0.0
          %723 = vmatpush2.xpose.msra.mxu0 0.0
          %724 = vmatprep.subr.mxu0 0.0
          %725 = vmatpush2.xpose.msra.mxu0 0.0
          %726 = vmatprep.subr.mxu0 0.0
          %727 = vmatpush2.xpose.msra.mxu0 0.0
          %728 = vmatprep.subr.mxu0 0.0
          %729 = vmatpush2.xpose.msra.mxu0 0.0
          %730 = vmatprep.mubr.f32.mxu0 0.0
          %731 = vmatmul.mubr.f32.gmra.mxu0 %v655
          %v732 = vpop.f32.mrf.mxu0
          %v733 = vadd.f32 0.0, %v732
          %v734 = vpop.f32.mrf.mxu0
          %735 = vmatprep.mubr.f32.mxu0 0.0
          %736 = vmatmul.mubr.f32.gmra.mxu0 %v658
          %v737 = vpop.f32.mrf.mxu0
          %v738 = vadd.f32 0.0, %v737
          %v739 = vpop.f32.mrf.mxu0
          %740 = vdwg.mxu0
          %v741 = vlaneseq
          %v742 = vshrl.u32 %v741, 7
          %v743 = vadd.s32 %v742, 8
          %v744 = vstv %s639
          %v745 = vadd.s32 %v744, %v742
          %v746 = vadd.s32 %v744, %v743
          %v747 = vlaneseq
          %v748 = vand.u32 %v747, 127
          %v749 = vstv %s638
          %v750 = vadd.s32 %v749, %v748
          %vm751 = vcmp.le.s32.totalorder %v750, %v745
          %vm752 = vcmp.le.s32.totalorder %v750, %v746
          %v753 = vsel %vm751, %v733, -1e+30
          %v754 = vsel %vm752, %v738, -1e+30
          %v755 = vld [vmem:[#allocation4] sm:$0xff]
          %v756 = vld [vmem:[#allocation4 + $0x8] sm:$0xff]
          %v757 = vsel %vm653, %v753, -inf
          %758 = vmax.xlane.f32.xlu0 %v757
          %v759 = vpop.xlane.xlu0 %758
          %v760 = vsel %vm653, %v754, -inf
          %761 = vmax.xlane.f32.xlu0 %v760
          %v762 = vpop.xlane.xlu0 %761
          %v763 = vmax.f32 %v755, %v759
          %v764 = vmax.f32 %v756, %v762
          %v765 = vsub.f32 %v755, %v763
          %v766 = vsub.f32 %v756, %v764
          %v767 = vmul.f32 %v765, 1.442695
          %v768 = vpow.pop %v767
          %v769 = vmul.f32 %v766, 1.442695
          %v770 = vpow.pop %v769
          %772 = vset.pattern.permute.xlu0 0
          %773 = vperm.xlu0 %772, %v763
          %v774 = vpop.permute.xlu0 %773
          %777 = vset.pattern.permute.xlu0 0
          %778 = vperm.xlu0 %777, %v764
          %v779 = vpop.permute.xlu0 %778
          %v781 = vsub.f32 %v753, %v774
          %v782 = vsub.f32 %v754, %v779
          %v783 = vmul.f32 %v781, 1.442695
          %v784 = vpow.pop %v783
          %v785 = vmul.f32 %v782, 1.442695
          %v786 = vpow.pop %v785
          %v787 = vld [vmem:[#allocation5] sm:$0xff]
          %v788 = vld [vmem:[#allocation5 + $0x8] sm:$0xff]
          %v789 = vmul.f32 %v768, %v787
          %v790 = vmul.f32 %v770, %v788
          %v791 = vsel %vm653, %v784, 0.0
          %792 = vadd.xlane.f32.xlu0 %v791
          %v793 = vpop.xlane.xlu0 %792
          %v794 = vsel %vm653, %v786, 0.0
          %795 = vadd.xlane.f32.xlu0 %v794
          %v796 = vpop.xlane.xlu0 %795
          %v797 = vadd.f32 %v789, %v793
          %v798 = vadd.f32 %v790, %v796
          %vm799 = vcmask 7168
          %800 = vst.msk [vmem:[#allocation5] sm:$0xff] %vm799, %v797
          %801 = vst.msk [vmem:[#allocation5 + $0x8] sm:$0xff] %vm799, %v798
          %v802 = vld [vmem:[#allocation6] sm:$0xff]
          %v803 = vld [vmem:[#allocation6 + $0x8] sm:$0xff]
          %805 = vset.pattern.permute.xlu0 0
          %806 = vperm.xlu0 %805, %v768
          %v807 = vpop.permute.xlu0 %806
          %810 = vset.pattern.permute.xlu0 0
          %811 = vperm.xlu0 %810, %v770
          %v812 = vpop.permute.xlu0 %811
          %v814 = vmul.f32 %v807, %v802
          %v815 = vmul.f32 %v812, %v803
          %816 = vrot.lane.b32.xlu0 %v649, 112
          %v817 = vpop.permute.xlu0 %816
          %818 = vrot.lane.b32.xlu0 %v650, 112
          %v819 = vpop.permute.xlu0 %818
          %v823 = vsel %vm653, %v784, 0
          %v826 = vsel %vm653, %v786, 0
          %828 = vmatprep.subr.mxu0 0.0
          %829 = vmatpush1.msra.mxu0 0.0
          %830 = vmatprep.subr.mxu0 0.0
          %831 = vmatpush1.msra.mxu0 0.0
          %832 = vmatprep.subr.mxu0 0.0
          %833 = vmatpush1.msra.mxu0 0.0
          %834 = vmatprep.subr.mxu0 0.0
          %835 = vmatpush1.msra.mxu0 0.0
          %836 = vmatprep.subr.mxu0 0.0
          %837 = vmatpush1.msra.mxu0 0.0
          %838 = vmatprep.subr.mxu0 0.0
          %839 = vmatpush1.msra.mxu0 0.0
          %840 = vmatprep.subr.mxu0 0.0
          %841 = vmatpush1.msra.mxu0 0.0
          %842 = vmatprep.subr.mxu0 0.0
          %843 = vmatpush1.msra.mxu0 0.0
          %844 = vmatprep.subr.mxu0 0.0
          %845 = vmatpush1.msra.mxu0 0.0
          %846 = vmatprep.subr.mxu0 0.0
          %847 = vmatpush1.msra.mxu0 0.0
          %848 = vmatprep.subr.mxu0 0.0
          %849 = vmatpush1.msra.mxu0 0.0
          %850 = vmatprep.subr.mxu0 0.0
          %851 = vmatpush1.msra.mxu0 0.0
          %852 = vmatprep.subr.mxu0 0.0
          %853 = vmatpush1.msra.mxu0 0.0
          %854 = vmatprep.subr.mxu0 0.0
          %855 = vmatpush1.msra.mxu0 0.0
          %856 = vmatprep.subr.mxu0 0.0
          %857 = vmatpush1.msra.mxu0 %v819
          %858 = vmatprep.subr.mxu0 0.0
          %859 = vmatpush1.msra.mxu0 %v817
          %860 = vmatprep.subr.mxu0 0.0
          %861 = vmatpush2.msra.mxu0 0.0
          %862 = vmatprep.subr.mxu0 0.0
          %863 = vmatpush2.msra.mxu0 0.0
          %864 = vmatprep.subr.mxu0 0.0
          %865 = vmatpush2.msra.mxu0 0.0
          %866 = vmatprep.subr.mxu0 0.0
          %867 = vmatpush2.msra.mxu0 0.0
          %868 = vmatprep.subr.mxu0 0.0
          %869 = vmatpush2.msra.mxu0 0.0
          %870 = vmatprep.subr.mxu0 0.0
          %871 = vmatpush2.msra.mxu0 0.0
          %872 = vmatprep.subr.mxu0 0.0
          %873 = vmatpush2.msra.mxu0 0.0
          %874 = vmatprep.subr.mxu0 0.0
          %875 = vmatpush2.msra.mxu0 0.0
          %876 = vmatprep.subr.mxu0 0.0
          %877 = vmatpush2.msra.mxu0 0.0
          %878 = vmatprep.subr.mxu0 0.0
          %879 = vmatpush2.msra.mxu0 0.0
          %880 = vmatprep.subr.mxu0 0.0
          %881 = vmatpush2.msra.mxu0 0.0
          %882 = vmatprep.subr.mxu0 0.0
          %883 = vmatpush2.msra.mxu0 0.0
          %884 = vmatprep.subr.mxu0 0.0
          %885 = vmatpush2.msra.mxu0 0.0
          %886 = vmatprep.subr.mxu0 0.0
          %887 = vmatpush2.msra.mxu0 0.0
          %888 = vmatprep.subr.mxu0 0.0
          %889 = vmatpush2.msra.mxu0 0.0
          %890 = vmatprep.subr.mxu0 0.0
          %891 = vmatpush2.msra.mxu0 0.0
          %892 = vmatprep.mubr.f32.mxu0 0.0
          %893 = vmatmul.mubr.f32.gmra.mxu0 %v823
          %v894 = vpop.f32.mrf.mxu0
          %v895 = vadd.f32 0.0, %v894
          %v896 = vpop.f32.mrf.mxu0
          %897 = vmatprep.mubr.f32.mxu0 0.0
          %898 = vmatmul.mubr.f32.gmra.mxu0 %v826
          %v899 = vpop.f32.mrf.mxu0
          %v900 = vadd.f32 0.0, %v899
          %v901 = vpop.f32.mrf.mxu0
          %902 = vdwg.mxu0
          %v903 = vadd.f32 %v814, %v895
          %v904 = vadd.f32 %v815, %v900
          %905 = vst.msk [vmem:[#allocation6] sm:$0xff] %vm653, %v903
          %906 = vst.msk [vmem:[#allocation6 + $0x8] sm:$0xff] %vm653, %v904
          %907 = vst.msk [vmem:[#allocation4] sm:$0xff] %vm799, %v763
          %908 = vst.msk [vmem:[#allocation4 + $0x8] sm:$0xff] %vm799, %v764
        $region68: #{tpu_custom_call.1} parent=43 // pred_fallthru
          _
        %p909 = scmp.eq.s32.totalorder %s35, 1
        // Predicated region
        $region69: #{tpu_custom_call.1} parent=43 // pred_check
          %p910 = pneg %p909
        $region70: #{tpu_custom_call.1} parent=43 // pred_check_branch
          %912 = sbr.rel (%p910) target = $region72
        $region71: #{tpu_custom_call.1} parent=43 // pred_region
          %v913 = vld [vmem:[#allocation6] sm:$0xff]
          %v914 = vld [vmem:[#allocation6 + $0x8] sm:$0xff]
          %v915 = vld [vmem:[#allocation5] sm:$0xff]
          %v916 = vld [vmem:[#allocation5 + $0x8] sm:$0xff]
          %918 = vset.pattern.permute.xlu0 0
          %919 = vperm.xlu0 %918, %v915
          %v920 = vpop.permute.xlu0 %919
          %923 = vset.pattern.permute.xlu0 0
          %924 = vperm.xlu0 %923, %v916
          %v925 = vpop.permute.xlu0 %924
          %v927 = vrcp.pop %v920
          %v928 = vmul.f32 %v913, %v927
          %v929 = vrcp.pop %v925
          %v930 = vmul.f32 %v914, %v929
          %v931 = vld [vmem:[#allocation7] sm:$0xff]
          %v932 = vld [vmem:[#allocation7 + $0x8] sm:$0xff]
          %v933 = vld [vmem:[%s351] sm:$0xff]
          %v934 = vld [vmem:[%s351 + $0x8] sm:$0xff]
          %vm935 = vcmask 130048
          %v937 = vsel %vm935, %v928, 0
          %v940 = vsel %vm935, %v930, 0
          %942 = vmatprep.subr.mxu0 0.0
          %943 = vmatpush1.msra.mxu0 0.0
          %944 = vmatprep.subr.mxu0 0.0
          %945 = vmatpush1.msra.mxu0 0.0
          %946 = vmatprep.subr.mxu0 0.0
          %947 = vmatpush1.msra.mxu0 0.0
          %948 = vmatprep.subr.mxu0 0.0
          %949 = vmatpush1.msra.mxu0 0.0
          %950 = vmatprep.subr.mxu0 0.0
          %951 = vmatpush1.msra.mxu0 0.0
          %952 = vmatprep.subr.mxu0 0.0
          %953 = vmatpush1.msra.mxu0 0.0
          %954 = vmatprep.subr.mxu0 0.0
          %955 = vmatpush1.msra.mxu0 0.0
          %956 = vmatprep.subr.mxu0 0.0
          %957 = vmatpush1.msra.mxu0 0.0
          %958 = vmatprep.subr.mxu0 0.0
          %959 = vmatpush1.msra.mxu0 0.0
          %960 = vmatprep.subr.mxu0 0.0
          %961 = vmatpush1.msra.mxu0 0.0
          %962 = vmatprep.subr.mxu0 0.0
          %963 = vmatpush1.msra.mxu0 0.0
          %964 = vmatprep.subr.mxu0 0.0
          %965 = vmatpush1.msra.mxu0 0.0
          %966 = vmatprep.subr.mxu0 0.0
          %967 = vmatpush1.msra.mxu0 0.0
          %968 = vmatprep.subr.mxu0 0.0
          %969 = vmatpush1.msra.mxu0 0.0
          %970 = vmatprep.subr.mxu0 0.0
          %971 = vmatpush1.msra.mxu0 %v934
          %972 = vmatprep.subr.mxu0 0.0
          %973 = vmatpush1.msra.mxu0 %v933
          %974 = vmatprep.subr.mxu0 0.0
          %975 = vmatpush2.msra.mxu0 0.0
          %976 = vmatprep.subr.mxu0 0.0
          %977 = vmatpush2.msra.mxu0 0.0
          %978 = vmatprep.subr.mxu0 0.0
          %979 = vmatpush2.msra.mxu0 0.0
          %980 = vmatprep.subr.mxu0 0.0
          %981 = vmatpush2.msra.mxu0 0.0
          %982 = vmatprep.subr.mxu0 0.0
          %983 = vmatpush2.msra.mxu0 0.0
          %984 = vmatprep.subr.mxu0 0.0
          %985 = vmatpush2.msra.mxu0 0.0
          %986 = vmatprep.subr.mxu0 0.0
          %987 = vmatpush2.msra.mxu0 0.0
          %988 = vmatprep.subr.mxu0 0.0
          %989 = vmatpush2.msra.mxu0 0.0
          %990 = vmatprep.subr.mxu0 0.0
          %991 = vmatpush2.msra.mxu0 0.0
          %992 = vmatprep.subr.mxu0 0.0
          %993 = vmatpush2.msra.mxu0 0.0
          %994 = vmatprep.subr.mxu0 0.0
          %995 = vmatpush2.msra.mxu0 0.0
          %996 = vmatprep.subr.mxu0 0.0
          %997 = vmatpush2.msra.mxu0 0.0
          %998 = vmatprep.subr.mxu0 0.0
          %999 = vmatpush2.msra.mxu0 0.0
          %1000 = vmatprep.subr.mxu0 0.0
          %1001 = vmatpush2.msra.mxu0 0.0
          %1002 = vmatprep.subr.mxu0 0.0
          %1003 = vmatpush2.msra.mxu0 0.0
          %1004 = vmatprep.subr.mxu0 0.0
          %1005 = vmatpush2.msra.mxu0 0.0
          %1006 = vmatprep.mubr.f32.mxu0 0.0
          %1007 = vmatmul.mubr.f32.gmra.mxu0 %v937
          %v1008 = vpop.f32.mrf.mxu0
          %v1009 = vadd.f32 0.0, %v1008
          %v1010 = vpop.f32.mrf.mxu0
          %1011 = vmatprep.mubr.f32.mxu0 0.0
          %1012 = vmatmul.mubr.f32.gmra.mxu0 %v940
          %v1013 = vpop.f32.mrf.mxu0
          %v1014 = vadd.f32 0.0, %v1013
          %v1015 = vpop.f32.mrf.mxu0
          %1016 = vdwg.mxu0
          %v1017 = vadd.f32 %v931, %v1009
          %v1018 = vadd.f32 %v932, %v1014
          %vm1019 = vcmask 523264
          %1020 = vst.msk [vmem:[#allocation7] sm:$0xff] %vm1019, %v1017
          %1021 = vst.msk [vmem:[#allocation7 + $0x8] sm:$0xff] %vm1019, %v1018
        $region72: #{tpu_custom_call.1} parent=43 // pred_fallthru
          _
        %p1022 = scmp.eq.s32.totalorder %s34, 3
        %p1023 = pnand %p1022, %p909
        %p1024 = pneg %p1023
        // Predicated region
        $region73: #{tpu_custom_call.1} parent=43 // pred_check
          _
        $region74: #{tpu_custom_call.1} parent=43 // pred_check_branch
          %1026 = sbr.rel (%p1023) target = $region76
        $region75: #{tpu_custom_call.1} parent=43 // pred_region
          %v1027 = vld [vmem:[#allocation7] sm:$0xff]
          %v1028 = vld [vmem:[#allocation7 + $0x8] sm:$0xff]
          %v1029 = vld [vmem:[%s5] sm:$0x1]
          %v1031 = vlaneseq
          %v1032 = vshrl.u32 %v1031, 7
          %v1033 = vsub.s32 0, %v1032
          %v1034 = vrot.slane %v1029, %v1033
          %v1036 = vadd.f32 %v1027, %v1034
          %v1037 = vadd.f32 %v1028, %v1034
          %vm1038 = vcmask 523264
          %1039 = vst.msk [vmem:[%s403] sm:$0xff] %vm1038, %v1036
          %1040 = vst.msk [vmem:[%s403 + $0x8] sm:$0xff] %vm1038, %v1037
        $region76: #{tpu_custom_call.1} parent=43 // pred_fallthru
          _
        %s1041 = sand.u32 %s221, 1
        %s1042 = scalar_lea.sflag [#allocation10], %s1041
        %s1043 = sand.u32 %s221, 1
        %s1044 = smul.addr %s1043, 16
        %s1045 = scalar_lea.vmem [#allocation13], %s1044
        // Predicated region
        $region77: #{tpu_custom_call.1} parent=43 // pred_check
          %p1046 = pneg %p231
        $region78: #{tpu_custom_call.1} parent=43 // pred_check_branch
          %1048 = sbr.rel (%p1046) target = $region80
        $region79: #{tpu_custom_call.1} parent=43 // pred_region
          %s1049 = smul.u32 2, %s33
          %s1051 = ssub.s32 256, 256
          %1052 = vsyncadd %s1042, %s1051
          %s1053 = smul.addr %s32, 4
          %s1054 = sadd.s32 %s1049, %s1053
          %s1055 = smul.addr %s1054, 128
          %s1056 = scalar_lea.hbm %s6, %s1055
          %s1057 = sshll.u32 %s1045, 4
          %s1058 = int_to_ptr.vmem [resolvable:$true] %s1057
          %1063 = dma.vmem_to_hbm [thread:$0]  %s1058, 256, %s1056, %s1042, 128, 128, 8
        $region80: #{tpu_custom_call.1} parent=43 // pred_fallthru
          _
      $region44: #{tpu_custom_call.1} parent=5 // pred_fallthru
        _
      %p1064 = scmp.le.s32.totalorder 2, %s21
      // Predicated region
      $region81: #{tpu_custom_call.1} parent=5 // pred_check
        %p1065 = pneg %p1064
      $region82: #{tpu_custom_call.1} parent=5 // pred_check_branch
        %1067 = sbr.rel (%p1065) target = $region84
      $region83: #{tpu_custom_call.1} parent=5 // pred_region
        %s1068 = ssub.s32 %s21, 2
        // Predicated region
        $region85: #{tpu_custom_call.1} parent=83 // pred_check
          %p1069 = pneg %p237
        $region86: #{tpu_custom_call.1} parent=83 // pred_check_branch
          %1071 = sbr.rel (%p1069) target = $region88
        $region87: #{tpu_custom_call.1} parent=83 // pred_region
          %s1072 = sand.u32 %s222, 1
          %s1073 = scalar_lea.sflag [#allocation10], %s1072
          %s1074 = sand.u32 %s222, 1
          %s1075 = smul.addr %s1074, 16
          %s1076 = scalar_lea.vmem [#allocation13], %s1075
          %1077 = dma.done %s1073, 256
        $region88: #{tpu_custom_call.1} parent=83 // pred_fallthru
          _
      $region84: #{tpu_custom_call.1} parent=5 // pred_fallthru
        _
    $region6: #{tpu_custom_call.1} parent=1 // loop_footer
      %s25 = sadd.s32 1, %s21
    $region7: #{tpu_custom_call.1} parent=1 // loop_footer_branch
      %20 = sbr.rel target = $region3
    $region8: #{tpu_custom_call.1} parent=1 // loop_exit
      _
    %1078 = vsyncpa [#allocation9], 1
    %s1079 = scalar_lea.sflag [#allocation9], 1
    %1080 = vsyncpa %s1079, 1
    %1081 = vsyncpa [#allocation12], 1
    %s1082 = scalar_lea.sflag [#allocation12], 1
    %1083 = vsyncpa %s1082, 1
    %1084 = vsyncpa [#allocation10], 1
    %s1085 = scalar_lea.sflag [#allocation10], 1
    %1086 = vsyncpa %s1085, 1

</llo_original>
